<compile_context>
chip_gen: v7x
topology: tpu7x:2x2x1
jax: 0.10.0
libtpu: 0.0.40
codegen_flags: <defaults>
</compile_context>

<pallas_src>
import functools
import math

import jax
import jax.numpy as jnp
from jax import lax
from jax.experimental import pallas as pl
from jax.experimental.pallas import tpu as pltpu


def _gelu(x, approximate):
    if approximate:
        # tanh approximation -> EUP slot (relieves the VALU); opt-in only.
        c = math.sqrt(2.0 / math.pi)
        return 0.5 * x * (1.0 + jnp.tanh(c * (x + 0.044715 * x * x * x)))
    # exact erf-based GELU (torch.nn.functional.gelu default)
    return 0.5 * x * (1.0 + lax.erf(x * (1.0 / math.sqrt(2.0))))


def _cal_error_kernel(c1_ref, c2_ref, c3_ref, w0_ref, w1_ref, bias_ref,
                      o_ref, cat_ref, *, approximate_gelu):
    _, C, H, _ = c1_ref.shape
    Hout = o_ref.shape[2]  # 2H - 1
    f32 = jnp.float32

    # Stage the height-concatenated input once per grid step; both conv taps
    # become simple row-offset slices of this single buffer.
    cat_ref[:, 0:H, :] = c1_ref[0]
    cat_ref[:, H:2 * H, :] = c2_ref[0]

    for co in range(C):
        # (2,1) conv with the BN scale pre-folded into the taps.  Operands are
        # re-sliced from VMEM per use (cheap vld, no hoisted slabs); the f32
        # SMEM weights promote the accumulation to f32.
        acc = None
        for ci in range(C):
            top = cat_ref[ci, 0:Hout, :]      # tap at row h
            bot = cat_ref[ci, 1:2 * H, :]     # tap at row h + 1
            term = w0_ref[co, ci] * top + w1_ref[co, ci] * bot
            acc = term if acc is None else acc + term
        relu = jnp.maximum(acc + bias_ref[co], 0.0)   # folded inference BN + ReLU
        g = _gelu(c3_ref[0, co].astype(f32), approximate_gelu)
        o_ref[0, co] = (g - relu).astype(o_ref.dtype)


def _choose_tile_w(W, B):
    """Largest multiple-of-128 divisor of W (capped at 1024), else full W.

    Guarantees TW | W (fixes the tail-coverage bug).  If the resulting grid
    would have a single step, split once more (when 128-alignment allows) so
    both v7x TensorCores get work.
    """
    if W % 128 != 0:
        return W
    tw = max(d for d in range(128, min(W, 1024) + 1, 128) if W % d == 0)
    if B * (W // tw) < 2 and tw % 256 == 0:
        tw //= 2
    return tw


def cal_error(c1, c2, c3, w, gamma, beta, running_mean, running_var,
              eps=1e-5, approximate_gelu=False):
    """c1, c2: (B, C, H, W); c3: (B, C, 2H-1, W).  Returns e: (B, C, 2H-1, W)."""
    B, C, H, W = c1.shape
    Hout = 2 * H - 1
    assert c2.shape == (B, C, H, W)
    assert c3.shape == (B, C, Hout, W)

    # Fold BatchNorm (inference mode) into the conv taps + per-channel bias.
    scale = (gamma / jnp.sqrt(running_var + eps)).astype(jnp.float32)
    bias = (beta - running_mean * scale).astype(jnp.float32)
    w0 = w[:, :, 0, 0].astype(jnp.float32) * scale[:, None]   # BN-scaled tap 0
    w1 = w[:, :, 1, 0].astype(jnp.float32) * scale[:, None]   # BN-scaled tap 1

    TW = _choose_tile_w(W, B)
    grid = (B, W // TW)

    kernel = functools.partial(_cal_error_kernel,
                               approximate_gelu=approximate_gelu)

    out = pl.pallas_call(
        kernel,
        out_shape=jax.ShapeDtypeStruct((B, C, Hout, W), c3.dtype),
        grid=grid,
        in_specs=[
            pl.BlockSpec((1, C, H, TW), lambda b, wi: (b, 0, 0, wi)),
            pl.BlockSpec((1, C, H, TW), lambda b, wi: (b, 0, 0, wi)),
            pl.BlockSpec((1, C, Hout, TW), lambda b, wi: (b, 0, 0, wi)),
            pl.BlockSpec(memory_space=pltpu.MemorySpace.SMEM),   # w0 (BN-scaled)
            pl.BlockSpec(memory_space=pltpu.MemorySpace.SMEM),   # w1 (BN-scaled)
            pl.BlockSpec(memory_space=pltpu.MemorySpace.SMEM),   # bias
        ],
        out_specs=pl.BlockSpec((1, C, Hout, TW), lambda b, wi: (b, 0, 0, wi)),
        scratch_shapes=[pltpu.VMEM((C, 2 * H, TW), c1.dtype)],
        compiler_params=pltpu.CompilerParams(
            dimension_semantics=("parallel", "parallel")),
    )(c1, c2, c3, w0, w1, bias)
    return out


if __name__ == "__main__":
    B, C, H, W = 2, 4, 8, 16
    Hout = 2 * H - 1

    key = jax.random.PRNGKey(0)
    k1, k2, k3, kw = jax.random.split(key, 4)

    c1 = jax.random.normal(k1, (B, C, H, W), dtype=jnp.float32)
    c2 = jax.random.normal(k2, (B, C, H, W), dtype=jnp.float32)
    c3 = jax.random.normal(k3, (B, C, Hout, W), dtype=jnp.float32)

    # deterministic parameter init (shapes from nn.Conv2d(C, C, (2,1), bias=False)
    # and nn.BatchNorm2d(C))
    fan_in = C * 2 * 1
    bound = 1.0 / math.sqrt(fan_in)
    w = jax.random.uniform(kw, (C, C, 2, 1), dtype=jnp.float32,
                           minval=-bound, maxval=bound)
    gamma = 1.0 + 0.1 * jnp.arange(C, dtype=jnp.float32)
    beta = 0.05 * jnp.arange(C, dtype=jnp.float32)
    running_mean = 0.01 * jnp.arange(C, dtype=jnp.float32)
    running_var = 1.0 + 0.02 * jnp.arange(C, dtype=jnp.float32)

    e = cal_error(c1, c2, c3, w, gamma, beta, running_mean, running_var)
    jax.block_until_ready(e)

    # sanity: pure-JAX reference of the same math (exact erf GELU, folded BN)
    xcat = jnp.concatenate([c1, c2], axis=2)
    conv = (jnp.einsum("bchw,oc->bohw", xcat[:, :, :Hout, :], w[:, :, 0, 0])
            + jnp.einsum("bchw,oc->bohw", xcat[:, :, 1:Hout + 1, :], w[:, :, 1, 0]))
    sc = (gamma / jnp.sqrt(running_var + 1e-5)).reshape(1, C, 1, 1)
    bs = (beta - running_mean * gamma / jnp.sqrt(running_var + 1e-5)).reshape(1, C, 1, 1)
    ref = (0.5 * c3 * (1.0 + lax.erf(c3 / math.sqrt(2.0)))
           - jnp.maximum(conv * sc + bs, 0.0))
    assert e.shape == (B, C, Hout, W)
    assert jnp.allclose(e, ref, atol=1e-5, rtol=1e-5)

    print("KERNEL_OK")
</pallas_src>

<mosaic_0001>
module attributes {stable_mosaic.version = 11 : i64} {
  func.func @_cal_error_kernel(%arg0: i32, %arg1: i32, %arg2: memref<1x4x8x16xf32, #tpu.memory_space<vmem>>, %arg3: memref<1x4x8x16xf32, #tpu.memory_space<vmem>>, %arg4: memref<1x4x15x16xf32, #tpu.memory_space<vmem>>, %arg5: memref<4x4xf32, #tpu.memory_space<smem>>, %arg6: memref<4x4xf32, #tpu.memory_space<smem>>, %arg7: memref<4xf32, #tpu.memory_space<smem>>, %arg8: memref<1x4x15x16xf32, #tpu.memory_space<vmem>>, %arg9: memref<4x16x16xf32, #tpu.memory_space<vmem>>) attributes {dimension_semantics = [#tpu.dimension_semantics<parallel>, #tpu.dimension_semantics<parallel>], iteration_bounds = array<i64: 2, 1>, scalar_prefetch = 0 : i64, scratch_operands = 1 : i64, tpu.core_type = #tpu.core_type<tc>, window_params = [{transform_indices = @transform_0, window_bounds = array<i64: 1, 4, 8, 16>}, {transform_indices = @transform_1, window_bounds = array<i64: 1, 4, 8, 16>}, {transform_indices = @transform_2, window_bounds = array<i64: 1, 4, 15, 16>}, {transform_indices = @transform_3, window_bounds = array<i64: 4, 4>}, {transform_indices = @transform_4, window_bounds = array<i64: 4, 4>}, {transform_indices = @transform_5, window_bounds = array<i64: 4>}, {transform_indices = @transform_6, window_bounds = array<i64: 1, 4, 15, 16>}]} {
    %c0 = arith.constant 0 : index
    %c0_0 = arith.constant 0 : index
    %c0_1 = arith.constant 0 : index
    %c0_2 = arith.constant 0 : index
    %0 = vector.load %arg2[%c0, %c0_0, %c0_1, %c0_2] : memref<1x4x8x16xf32, #tpu.memory_space<vmem>>, vector<1x4x8x16xf32>
    %1 = vector.shape_cast %0 : vector<1x4x8x16xf32> to vector<4x8x16xf32>
    %c0_3 = arith.constant 0 : index
    %c0_4 = arith.constant 0 : index
    %c0_5 = arith.constant 0 : index
    %2 = vector.load %arg9[%c0_3, %c0_4, %c0_5] : memref<4x16x16xf32, #tpu.memory_space<vmem>>, vector<4x8x16xf32>
    tpu.vector_store %arg9[%c0_3, %c0_4, %c0_5], %1 {strides = array<i32>} : memref<4x16x16xf32, #tpu.memory_space<vmem>>, vector<4x8x16xf32>,
    %c0_6 = arith.constant 0 : index
    %c0_7 = arith.constant 0 : index
    %c0_8 = arith.constant 0 : index
    %c0_9 = arith.constant 0 : index
    %3 = vector.load %arg3[%c0_6, %c0_7, %c0_8, %c0_9] : memref<1x4x8x16xf32, #tpu.memory_space<vmem>>, vector<1x4x8x16xf32>
    %4 = vector.shape_cast %3 : vector<1x4x8x16xf32> to vector<4x8x16xf32>
    %c0_10 = arith.constant 0 : index
    %c8 = arith.constant 8 : index
    %c0_11 = arith.constant 0 : index
    %5 = vector.load %arg9[%c0_10, %c8, %c0_11] : memref<4x16x16xf32, #tpu.memory_space<vmem>>, vector<4x8x16xf32>
    tpu.vector_store %arg9[%c0_10, %c8, %c0_11], %4 {strides = array<i32>} : memref<4x16x16xf32, #tpu.memory_space<vmem>>, vector<4x8x16xf32>,
    %c0_12 = arith.constant 0 : index
    %c0_13 = arith.constant 0 : index
    %c0_14 = arith.constant 0 : index
    %6 = vector.load %arg9[%c0_12, %c0_13, %c0_14] : memref<4x16x16xf32, #tpu.memory_space<vmem>>, vector<1x15x16xf32>
    %7 = vector.shape_cast %6 : vector<1x15x16xf32> to vector<15x16xf32>
    %c0_15 = arith.constant 0 : index
    %c1 = arith.constant 1 : index
    %c0_16 = arith.constant 0 : index
    %8 = vector.load %arg9[%c0_15, %c1, %c0_16] : memref<4x16x16xf32, #tpu.memory_space<vmem>>, vector<1x15x16xf32>
    %9 = vector.shape_cast %8 : vector<1x15x16xf32> to vector<15x16xf32>
    %c0_17 = arith.constant 0 : index
    %c0_18 = arith.constant 0 : index
    %10 = memref.load %arg5[%c0_17, %c0_18] : memref<4x4xf32, #tpu.memory_space<smem>>
    %11 = vector.broadcast %10 : f32 to vector<15x16xf32>
    %12 = arith.mulf %11, %7 : vector<15x16xf32>
    %c0_19 = arith.constant 0 : index
    %c0_20 = arith.constant 0 : index
    %13 = memref.load %arg6[%c0_19, %c0_20] : memref<4x4xf32, #tpu.memory_space<smem>>
    %14 = vector.broadcast %13 : f32 to vector<15x16xf32>
    %15 = arith.mulf %14, %9 : vector<15x16xf32>
    %16 = arith.addf %12, %15 : vector<15x16xf32>
    %c1_21 = arith.constant 1 : index
    %c0_22 = arith.constant 0 : index
    %c0_23 = arith.constant 0 : index
    %17 = vector.load %arg9[%c1_21, %c0_22, %c0_23] : memref<4x16x16xf32, #tpu.memory_space<vmem>>, vector<1x15x16xf32>
    %18 = vector.shape_cast %17 : vector<1x15x16xf32> to vector<15x16xf32>
    %c1_24 = arith.constant 1 : index
    %c1_25 = arith.constant 1 : index
    %c0_26 = arith.constant 0 : index
    %19 = vector.load %arg9[%c1_24, %c1_25, %c0_26] : memref<4x16x16xf32, #tpu.memory_space<vmem>>, vector<1x15x16xf32>
    %20 = vector.shape_cast %19 : vector<1x15x16xf32> to vector<15x16xf32>
    %c0_27 = arith.constant 0 : index
    %c1_28 = arith.constant 1 : index
    %21 = memref.load %arg5[%c0_27, %c1_28] : memref<4x4xf32, #tpu.memory_space<smem>>
    %22 = vector.broadcast %21 : f32 to vector<15x16xf32>
    %23 = arith.mulf %22, %18 : vector<15x16xf32>
    %c0_29 = arith.constant 0 : index
    %c1_30 = arith.constant 1 : index
    %24 = memref.load %arg6[%c0_29, %c1_30] : memref<4x4xf32, #tpu.memory_space<smem>>
    %25 = vector.broadcast %24 : f32 to vector<15x16xf32>
    %26 = arith.mulf %25, %20 : vector<15x16xf32>
    %27 = arith.addf %23, %26 : vector<15x16xf32>
    %28 = arith.addf %16, %27 : vector<15x16xf32>
    %c2 = arith.constant 2 : index
    %c0_31 = arith.constant 0 : index
    %c0_32 = arith.constant 0 : index
    %29 = vector.load %arg9[%c2, %c0_31, %c0_32] : memref<4x16x16xf32, #tpu.memory_space<vmem>>, vector<1x15x16xf32>
    %30 = vector.shape_cast %29 : vector<1x15x16xf32> to vector<15x16xf32>
    %c2_33 = arith.constant 2 : index
    %c1_34 = arith.constant 1 : index
    %c0_35 = arith.constant 0 : index
    %31 = vector.load %arg9[%c2_33, %c1_34, %c0_35] : memref<4x16x16xf32, #tpu.memory_space<vmem>>, vector<1x15x16xf32>
    %32 = vector.shape_cast %31 : vector<1x15x16xf32> to vector<15x16xf32>
    %c0_36 = arith.constant 0 : index
    %c2_37 = arith.constant 2 : index
    %33 = memref.load %arg5[%c0_36, %c2_37] : memref<4x4xf32, #tpu.memory_space<smem>>
    %34 = vector.broadcast %33 : f32 to vector<15x16xf32>
    %35 = arith.mulf %34, %30 : vector<15x16xf32>
    %c0_38 = arith.constant 0 : index
    %c2_39 = arith.constant 2 : index
    %36 = memref.load %arg6[%c0_38, %c2_39] : memref<4x4xf32, #tpu.memory_space<smem>>
    %37 = vector.broadcast %36 : f32 to vector<15x16xf32>
    %38 = arith.mulf %37, %32 : vector<15x16xf32>
    %39 = arith.addf %35, %38 : vector<15x16xf32>
    %40 = arith.addf %28, %39 : vector<15x16xf32>
    %c3 = arith.constant 3 : index
    %c0_40 = arith.constant 0 : index
    %c0_41 = arith.constant 0 : index
    %41 = vector.load %arg9[%c3, %c0_40, %c0_41] : memref<4x16x16xf32, #tpu.memory_space<vmem>>, vector<1x15x16xf32>
    %42 = vector.shape_cast %41 : vector<1x15x16xf32> to vector<15x16xf32>
    %c3_42 = arith.constant 3 : index
    %c1_43 = arith.constant 1 : index
    %c0_44 = arith.constant 0 : index
    %43 = vector.load %arg9[%c3_42, %c1_43, %c0_44] : memref<4x16x16xf32, #tpu.memory_space<vmem>>, vector<1x15x16xf32>
    %44 = vector.shape_cast %43 : vector<1x15x16xf32> to vector<15x16xf32>
    %c0_45 = arith.constant 0 : index
    %c3_46 = arith.constant 3 : index
    %45 = memref.load %arg5[%c0_45, %c3_46] : memref<4x4xf32, #tpu.memory_space<smem>>
    %46 = vector.broadcast %45 : f32 to vector<15x16xf32>
    %47 = arith.mulf %46, %42 : vector<15x16xf32>
    %c0_47 = arith.constant 0 : index
    %c3_48 = arith.constant 3 : index
    %48 = memref.load %arg6[%c0_47, %c3_48] : memref<4x4xf32, #tpu.memory_space<smem>>
    %49 = vector.broadcast %48 : f32 to vector<15x16xf32>
    %50 = arith.mulf %49, %44 : vector<15x16xf32>
    %51 = arith.addf %47, %50 : vector<15x16xf32>
    %52 = arith.addf %40, %51 : vector<15x16xf32>
    %c0_49 = arith.constant 0 : index
    %53 = memref.load %arg7[%c0_49] : memref<4xf32, #tpu.memory_space<smem>>
    %54 = vector.broadcast %53 : f32 to vector<15x16xf32>
    %55 = arith.addf %52, %54 : vector<15x16xf32>
    %cst = arith.constant 0.000000e+00 : f32
    %56 = vector.broadcast %cst : f32 to vector<15x16xf32>
    %57 = arith.maximumf %55, %56 : vector<15x16xf32>
    %c0_50 = arith.constant 0 : index
    %c0_51 = arith.constant 0 : index
    %c0_52 = arith.constant 0 : index
    %c0_53 = arith.constant 0 : index
    %58 = vector.load %arg4[%c0_50, %c0_51, %c0_52, %c0_53] : memref<1x4x15x16xf32, #tpu.memory_space<vmem>>, vector<1x1x15x16xf32>
    %59 = vector.shape_cast %58 : vector<1x1x15x16xf32> to vector<15x16xf32>
    %cst_54 = arith.constant 5.000000e-01 : f32
    %60 = vector.broadcast %cst_54 : f32 to vector<15x16xf32>
    %61 = arith.mulf %60, %59 : vector<15x16xf32>
    %cst_55 = arith.constant 0.707106769 : f32
    %62 = vector.broadcast %cst_55 : f32 to vector<15x16xf32>
    %63 = arith.mulf %59, %62 : vector<15x16xf32>
    %64 = math.erf %63 : vector<15x16xf32>
    %cst_56 = arith.constant 1.000000e+00 : f32
    %65 = vector.broadcast %cst_56 : f32 to vector<15x16xf32>
    %66 = arith.addf %65, %64 : vector<15x16xf32>
    %67 = arith.mulf %61, %66 : vector<15x16xf32>
    %68 = arith.subf %67, %57 : vector<15x16xf32>
    %c0_57 = arith.constant 0 : index
    %c0_58 = arith.constant 0 : index
    %c0_59 = arith.constant 0 : index
    %c0_60 = arith.constant 0 : index
    %69 = vector.load %arg8[%c0_57, %c0_58, %c0_59, %c0_60] : memref<1x4x15x16xf32, #tpu.memory_space<vmem>>, vector<1x1x15x16xf32>
    %70 = vector.shape_cast %69 : vector<1x1x15x16xf32> to vector<15x16xf32>
    %71 = vector.shape_cast %68 : vector<15x16xf32> to vector<1x1x15x16xf32>
    tpu.vector_store %arg8[%c0_57, %c0_58, %c0_59, %c0_60], %71 {strides = array<i32>} : memref<1x4x15x16xf32, #tpu.memory_space<vmem>>, vector<1x1x15x16xf32>,
    %c0_61 = arith.constant 0 : index
    %c0_62 = arith.constant 0 : index
    %c0_63 = arith.constant 0 : index
    %72 = vector.load %arg9[%c0_61, %c0_62, %c0_63] : memref<4x16x16xf32, #tpu.memory_space<vmem>>, vector<1x15x16xf32>
    %73 = vector.shape_cast %72 : vector<1x15x16xf32> to vector<15x16xf32>
    %c0_64 = arith.constant 0 : index
    %c1_65 = arith.constant 1 : index
    %c0_66 = arith.constant 0 : index
    %74 = vector.load %arg9[%c0_64, %c1_65, %c0_66] : memref<4x16x16xf32, #tpu.memory_space<vmem>>, vector<1x15x16xf32>
    %75 = vector.shape_cast %74 : vector<1x15x16xf32> to vector<15x16xf32>
    %c1_67 = arith.constant 1 : index
    %c0_68 = arith.constant 0 : index
    %76 = memref.load %arg5[%c1_67, %c0_68] : memref<4x4xf32, #tpu.memory_space<smem>>
    %77 = vector.broadcast %76 : f32 to vector<15x16xf32>
    %78 = arith.mulf %77, %73 : vector<15x16xf32>
    %c1_69 = arith.constant 1 : index
    %c0_70 = arith.constant 0 : index
    %79 = memref.load %arg6[%c1_69, %c0_70] : memref<4x4xf32, #tpu.memory_space<smem>>
    %80 = vector.broadcast %79 : f32 to vector<15x16xf32>
    %81 = arith.mulf %80, %75 : vector<15x16xf32>
    %82 = arith.addf %78, %81 : vector<15x16xf32>
    %c1_71 = arith.constant 1 : index
    %c0_72 = arith.constant 0 : index
    %c0_73 = arith.constant 0 : index
    %83 = vector.load %arg9[%c1_71, %c0_72, %c0_73] : memref<4x16x16xf32, #tpu.memory_space<vmem>>, vector<1x15x16xf32>
    %84 = vector.shape_cast %83 : vector<1x15x16xf32> to vector<15x16xf32>
    %c1_74 = arith.constant 1 : index
    %c1_75 = arith.constant 1 : index
    %c0_76 = arith.constant 0 : index
    %85 = vector.load %arg9[%c1_74, %c1_75, %c0_76] : memref<4x16x16xf32, #tpu.memory_space<vmem>>, vector<1x15x16xf32>
    %86 = vector.shape_cast %85 : vector<1x15x16xf32> to vector<15x16xf32>
    %c1_77 = arith.constant 1 : index
    %c1_78 = arith.constant 1 : index
    %87 = memref.load %arg5[%c1_77, %c1_78] : memref<4x4xf32, #tpu.memory_space<smem>>
    %88 = vector.broadcast %87 : f32 to vector<15x16xf32>
    %89 = arith.mulf %88, %84 : vector<15x16xf32>
    %c1_79 = arith.constant 1 : index
    %c1_80 = arith.constant 1 : index
    %90 = memref.load %arg6[%c1_79, %c1_80] : memref<4x4xf32, #tpu.memory_space<smem>>
    %91 = vector.broadcast %90 : f32 to vector<15x16xf32>
    %92 = arith.mulf %91, %86 : vector<15x16xf32>
    %93 = arith.addf %89, %92 : vector<15x16xf32>
    %94 = arith.addf %82, %93 : vector<15x16xf32>
    %c2_81 = arith.constant 2 : index
    %c0_82 = arith.constant 0 : index
    %c0_83 = arith.constant 0 : index
    %95 = vector.load %arg9[%c2_81, %c0_82, %c0_83] : memref<4x16x16xf32, #tpu.memory_space<vmem>>, vector<1x15x16xf32>
    %96 = vector.shape_cast %95 : vector<1x15x16xf32> to vector<15x16xf32>
    %c2_84 = arith.constant 2 : index
    %c1_85 = arith.constant 1 : index
    %c0_86 = arith.constant 0 : index
    %97 = vector.load %arg9[%c2_84, %c1_85, %c0_86] : memref<4x16x16xf32, #tpu.memory_space<vmem>>, vector<1x15x16xf32>
    %98 = vector.shape_cast %97 : vector<1x15x16xf32> to vector<15x16xf32>
    %c1_87 = arith.constant 1 : index
    %c2_88 = arith.constant 2 : index
    %99 = memref.load %arg5[%c1_87, %c2_88] : memref<4x4xf32, #tpu.memory_space<smem>>
    %100 = vector.broadcast %99 : f32 to vector<15x16xf32>
    %101 = arith.mulf %100, %96 : vector<15x16xf32>
    %c1_89 = arith.constant 1 : index
    %c2_90 = arith.constant 2 : index
    %102 = memref.load %arg6[%c1_89, %c2_90] : memref<4x4xf32, #tpu.memory_space<smem>>
    %103 = vector.broadcast %102 : f32 to vector<15x16xf32>
    %104 = arith.mulf %103, %98 : vector<15x16xf32>
    %105 = arith.addf %101, %104 : vector<15x16xf32>
    %106 = arith.addf %94, %105 : vector<15x16xf32>
    %c3_91 = arith.constant 3 : index
    %c0_92 = arith.constant 0 : index
    %c0_93 = arith.constant 0 : index
    %107 = vector.load %arg9[%c3_91, %c0_92, %c0_93] : memref<4x16x16xf32, #tpu.memory_space<vmem>>, vector<1x15x16xf32>
    %108 = vector.shape_cast %107 : vector<1x15x16xf32> to vector<15x16xf32>
    %c3_94 = arith.constant 3 : index
    %c1_95 = arith.constant 1 : index
    %c0_96 = arith.constant 0 : index
    %109 = vector.load %arg9[%c3_94, %c1_95, %c0_96] : memref<4x16x16xf32, #tpu.memory_space<vmem>>, vector<1x15x16xf32>
    %110 = vector.shape_cast %109 : vector<1x15x16xf32> to vector<15x16xf32>
    %c1_97 = arith.constant 1 : index
    %c3_98 = arith.constant 3 : index
    %111 = memref.load %arg5[%c1_97, %c3_98] : memref<4x4xf32, #tpu.memory_space<smem>>
    %112 = vector.broadcast %111 : f32 to vector<15x16xf32>
    %113 = arith.mulf %112, %108 : vector<15x16xf32>
    %c1_99 = arith.constant 1 : index
    %c3_100 = arith.constant 3 : index
    %114 = memref.load %arg6[%c1_99, %c3_100] : memref<4x4xf32, #tpu.memory_space<smem>>
    %115 = vector.broadcast %114 : f32 to vector<15x16xf32>
    %116 = arith.mulf %115, %110 : vector<15x16xf32>
    %117 = arith.addf %113, %116 : vector<15x16xf32>
    %118 = arith.addf %106, %117 : vector<15x16xf32>
    %c1_101 = arith.constant 1 : index
    %119 = memref.load %arg7[%c1_101] : memref<4xf32, #tpu.memory_space<smem>>
    %120 = vector.broadcast %119 : f32 to vector<15x16xf32>
    %121 = arith.addf %118, %120 : vector<15x16xf32>
    %cst_102 = arith.constant 0.000000e+00 : f32
    %122 = vector.broadcast %cst_102 : f32 to vector<15x16xf32>
    %123 = arith.maximumf %121, %122 : vector<15x16xf32>
    %c0_103 = arith.constant 0 : index
    %c1_104 = arith.constant 1 : index
    %c0_105 = arith.constant 0 : index
    %c0_106 = arith.constant 0 : index
    %124 = vector.load %arg4[%c0_103, %c1_104, %c0_105, %c0_106] : memref<1x4x15x16xf32, #tpu.memory_space<vmem>>, vector<1x1x15x16xf32>
    %125 = vector.shape_cast %124 : vector<1x1x15x16xf32> to vector<15x16xf32>
    %cst_107 = arith.constant 5.000000e-01 : f32
    %126 = vector.broadcast %cst_107 : f32 to vector<15x16xf32>
    %127 = arith.mulf %126, %125 : vector<15x16xf32>
    %cst_108 = arith.constant 0.707106769 : f32
    %128 = vector.broadcast %cst_108 : f32 to vector<15x16xf32>
    %129 = arith.mulf %125, %128 : vector<15x16xf32>
    %130 = math.erf %129 : vector<15x16xf32>
    %cst_109 = arith.constant 1.000000e+00 : f32
    %131 = vector.broadcast %cst_109 : f32 to vector<15x16xf32>
    %132 = arith.addf %131, %130 : vector<15x16xf32>
    %133 = arith.mulf %127, %132 : vector<15x16xf32>
    %134 = arith.subf %133, %123 : vector<15x16xf32>
    %c0_110 = arith.constant 0 : index
    %c1_111 = arith.constant 1 : index
    %c0_112 = arith.constant 0 : index
    %c0_113 = arith.constant 0 : index
    %135 = vector.load %arg8[%c0_110, %c1_111, %c0_112, %c0_113] : memref<1x4x15x16xf32, #tpu.memory_space<vmem>>, vector<1x1x15x16xf32>
    %136 = vector.shape_cast %135 : vector<1x1x15x16xf32> to vector<15x16xf32>
    %137 = vector.shape_cast %134 : vector<15x16xf32> to vector<1x1x15x16xf32>
    tpu.vector_store %arg8[%c0_110, %c1_111, %c0_112, %c0_113], %137 {strides = array<i32>} : memref<1x4x15x16xf32, #tpu.memory_space<vmem>>, vector<1x1x15x16xf32>,
    %c0_114 = arith.constant 0 : index
    %c0_115 = arith.constant 0 : index
    %c0_116 = arith.constant 0 : index
    %138 = vector.load %arg9[%c0_114, %c0_115, %c0_116] : memref<4x16x16xf32, #tpu.memory_space<vmem>>, vector<1x15x16xf32>
    %139 = vector.shape_cast %138 : vector<1x15x16xf32> to vector<15x16xf32>
    %c0_117 = arith.constant 0 : index
    %c1_118 = arith.constant 1 : index
    %c0_119 = arith.constant 0 : index
    %140 = vector.load %arg9[%c0_117, %c1_118, %c0_119] : memref<4x16x16xf32, #tpu.memory_space<vmem>>, vector<1x15x16xf32>
    %141 = vector.shape_cast %140 : vector<1x15x16xf32> to vector<15x16xf32>
    %c2_120 = arith.constant 2 : index
    %c0_121 = arith.constant 0 : index
    %142 = memref.load %arg5[%c2_120, %c0_121] : memref<4x4xf32, #tpu.memory_space<smem>>
    %143 = vector.broadcast %142 : f32 to vector<15x16xf32>
    %144 = arith.mulf %143, %139 : vector<15x16xf32>
    %c2_122 = arith.constant 2 : index
    %c0_123 = arith.constant 0 : index
    %145 = memref.load %arg6[%c2_122, %c0_123] : memref<4x4xf32, #tpu.memory_space<smem>>
    %146 = vector.broadcast %145 : f32 to vector<15x16xf32>
    %147 = arith.mulf %146, %141 : vector<15x16xf32>
    %148 = arith.addf %144, %147 : vector<15x16xf32>
    %c1_124 = arith.constant 1 : index
    %c0_125 = arith.constant 0 : index
    %c0_126 = arith.constant 0 : index
    %149 = vector.load %arg9[%c1_124, %c0_125, %c0_126] : memref<4x16x16xf32, #tpu.memory_space<vmem>>, vector<1x15x16xf32>
    %150 = vector.shape_cast %149 : vector<1x15x16xf32> to vector<15x16xf32>
    %c1_127 = arith.constant 1 : index
    %c1_128 = arith.constant 1 : index
    %c0_129 = arith.constant 0 : index
    %151 = vector.load %arg9[%c1_127, %c1_128, %c0_129] : memref<4x16x16xf32, #tpu.memory_space<vmem>>, vector<1x15x16xf32>
    %152 = vector.shape_cast %151 : vector<1x15x16xf32> to vector<15x16xf32>
    %c2_130 = arith.constant 2 : index
    %c1_131 = arith.constant 1 : index
    %153 = memref.load %arg5[%c2_130, %c1_131] : memref<4x4xf32, #tpu.memory_space<smem>>
    %154 = vector.broadcast %153 : f32 to vector<15x16xf32>
    %155 = arith.mulf %154, %150 : vector<15x16xf32>
    %c2_132 = arith.constant 2 : index
    %c1_133 = arith.constant 1 : index
    %156 = memref.load %arg6[%c2_132, %c1_133] : memref<4x4xf32, #tpu.memory_space<smem>>
    %157 = vector.broadcast %156 : f32 to vector<15x16xf32>
    %158 = arith.mulf %157, %152 : vector<15x16xf32>
    %159 = arith.addf %155, %158 : vector<15x16xf32>
    %160 = arith.addf %148, %159 : vector<15x16xf32>
    %c2_134 = arith.constant 2 : index
    %c0_135 = arith.constant 0 : index
    %c0_136 = arith.constant 0 : index
    %161 = vector.load %arg9[%c2_134, %c0_135, %c0_136] : memref<4x16x16xf32, #tpu.memory_space<vmem>>, vector<1x15x16xf32>
    %162 = vector.shape_cast %161 : vector<1x15x16xf32> to vector<15x16xf32>
    %c2_137 = arith.constant 2 : index
    %c1_138 = arith.constant 1 : index
    %c0_139 = arith.constant 0 : index
    %163 = vector.load %arg9[%c2_137, %c1_138, %c0_139] : memref<4x16x16xf32, #tpu.memory_space<vmem>>, vector<1x15x16xf32>
    %164 = vector.shape_cast %163 : vector<1x15x16xf32> to vector<15x16xf32>
    %c2_140 = arith.constant 2 : index
    %c2_141 = arith.constant 2 : index
    %165 = memref.load %arg5[%c2_140, %c2_141] : memref<4x4xf32, #tpu.memory_space<smem>>
    %166 = vector.broadcast %165 : f32 to vector<15x16xf32>
    %167 = arith.mulf %166, %162 : vector<15x16xf32>
    %c2_142 = arith.constant 2 : index
    %c2_143 = arith.constant 2 : index
    %168 = memref.load %arg6[%c2_142, %c2_143] : memref<4x4xf32, #tpu.memory_space<smem>>
    %169 = vector.broadcast %168 : f32 to vector<15x16xf32>
    %170 = arith.mulf %169, %164 : vector<15x16xf32>
    %171 = arith.addf %167, %170 : vector<15x16xf32>
    %172 = arith.addf %160, %171 : vector<15x16xf32>
    %c3_144 = arith.constant 3 : index
    %c0_145 = arith.constant 0 : index
    %c0_146 = arith.constant 0 : index
    %173 = vector.load %arg9[%c3_144, %c0_145, %c0_146] : memref<4x16x16xf32, #tpu.memory_space<vmem>>, vector<1x15x16xf32>
    %174 = vector.shape_cast %173 : vector<1x15x16xf32> to vector<15x16xf32>
    %c3_147 = arith.constant 3 : index
    %c1_148 = arith.constant 1 : index
    %c0_149 = arith.constant 0 : index
    %175 = vector.load %arg9[%c3_147, %c1_148, %c0_149] : memref<4x16x16xf32, #tpu.memory_space<vmem>>, vector<1x15x16xf32>
    %176 = vector.shape_cast %175 : vector<1x15x16xf32> to vector<15x16xf32>
    %c2_150 = arith.constant 2 : index
    %c3_151 = arith.constant 3 : index
    %177 = memref.load %arg5[%c2_150, %c3_151] : memref<4x4xf32, #tpu.memory_space<smem>>
    %178 = vector.broadcast %177 : f32 to vector<15x16xf32>
    %179 = arith.mulf %178, %174 : vector<15x16xf32>
    %c2_152 = arith.constant 2 : index
    %c3_153 = arith.constant 3 : index
    %180 = memref.load %arg6[%c2_152, %c3_153] : memref<4x4xf32, #tpu.memory_space<smem>>
    %181 = vector.broadcast %180 : f32 to vector<15x16xf32>
    %182 = arith.mulf %181, %176 : vector<15x16xf32>
    %183 = arith.addf %179, %182 : vector<15x16xf32>
    %184 = arith.addf %172, %183 : vector<15x16xf32>
    %c2_154 = arith.constant 2 : index
    %185 = memref.load %arg7[%c2_154] : memref<4xf32, #tpu.memory_space<smem>>
    %186 = vector.broadcast %185 : f32 to vector<15x16xf32>
    %187 = arith.addf %184, %186 : vector<15x16xf32>
    %cst_155 = arith.constant 0.000000e+00 : f32
    %188 = vector.broadcast %cst_155 : f32 to vector<15x16xf32>
    %189 = arith.maximumf %187, %188 : vector<15x16xf32>
    %c0_156 = arith.constant 0 : index
    %c2_157 = arith.constant 2 : index
    %c0_158 = arith.constant 0 : index
    %c0_159 = arith.constant 0 : index
    %190 = vector.load %arg4[%c0_156, %c2_157, %c0_158, %c0_159] : memref<1x4x15x16xf32, #tpu.memory_space<vmem>>, vector<1x1x15x16xf32>
    %191 = vector.shape_cast %190 : vector<1x1x15x16xf32> to vector<15x16xf32>
    %cst_160 = arith.constant 5.000000e-01 : f32
    %192 = vector.broadcast %cst_160 : f32 to vector<15x16xf32>
    %193 = arith.mulf %192, %191 : vector<15x16xf32>
    %cst_161 = arith.constant 0.707106769 : f32
    %194 = vector.broadcast %cst_161 : f32 to vector<15x16xf32>
    %195 = arith.mulf %191, %194 : vector<15x16xf32>
    %196 = math.erf %195 : vector<15x16xf32>
    %cst_162 = arith.constant 1.000000e+00 : f32
    %197 = vector.broadcast %cst_162 : f32 to vector<15x16xf32>
    %198 = arith.addf %197, %196 : vector<15x16xf32>
    %199 = arith.mulf %193, %198 : vector<15x16xf32>
    %200 = arith.subf %199, %189 : vector<15x16xf32>
    %c0_163 = arith.constant 0 : index
    %c2_164 = arith.constant 2 : index
    %c0_165 = arith.constant 0 : index
    %c0_166 = arith.constant 0 : index
    %201 = vector.load %arg8[%c0_163, %c2_164, %c0_165, %c0_166] : memref<1x4x15x16xf32, #tpu.memory_space<vmem>>, vector<1x1x15x16xf32>
    %202 = vector.shape_cast %201 : vector<1x1x15x16xf32> to vector<15x16xf32>
    %203 = vector.shape_cast %200 : vector<15x16xf32> to vector<1x1x15x16xf32>
    tpu.vector_store %arg8[%c0_163, %c2_164, %c0_165, %c0_166], %203 {strides = array<i32>} : memref<1x4x15x16xf32, #tpu.memory_space<vmem>>, vector<1x1x15x16xf32>,
    %c0_167 = arith.constant 0 : index
    %c0_168 = arith.constant 0 : index
    %c0_169 = arith.constant 0 : index
    %204 = vector.load %arg9[%c0_167, %c0_168, %c0_169] : memref<4x16x16xf32, #tpu.memory_space<vmem>>, vector<1x15x16xf32>
    %205 = vector.shape_cast %204 : vector<1x15x16xf32> to vector<15x16xf32>
    %c0_170 = arith.constant 0 : index
    %c1_171 = arith.constant 1 : index
    %c0_172 = arith.constant 0 : index
    %206 = vector.load %arg9[%c0_170, %c1_171, %c0_172] : memref<4x16x16xf32, #tpu.memory_space<vmem>>, vector<1x15x16xf32>
    %207 = vector.shape_cast %206 : vector<1x15x16xf32> to vector<15x16xf32>
    %c3_173 = arith.constant 3 : index
    %c0_174 = arith.constant 0 : index
    %208 = memref.load %arg5[%c3_173, %c0_174] : memref<4x4xf32, #tpu.memory_space<smem>>
    %209 = vector.broadcast %208 : f32 to vector<15x16xf32>
    %210 = arith.mulf %209, %205 : vector<15x16xf32>
    %c3_175 = arith.constant 3 : index
    %c0_176 = arith.constant 0 : index
    %211 = memref.load %arg6[%c3_175, %c0_176] : memref<4x4xf32, #tpu.memory_space<smem>>
    %212 = vector.broadcast %211 : f32 to vector<15x16xf32>
    %213 = arith.mulf %212, %207 : vector<15x16xf32>
    %214 = arith.addf %210, %213 : vector<15x16xf32>
    %c1_177 = arith.constant 1 : index
    %c0_178 = arith.constant 0 : index
    %c0_179 = arith.constant 0 : index
    %215 = vector.load %arg9[%c1_177, %c0_178, %c0_179] : memref<4x16x16xf32, #tpu.memory_space<vmem>>, vector<1x15x16xf32>
    %216 = vector.shape_cast %215 : vector<1x15x16xf32> to vector<15x16xf32>
    %c1_180 = arith.constant 1 : index
    %c1_181 = arith.constant 1 : index
    %c0_182 = arith.constant 0 : index
    %217 = vector.load %arg9[%c1_180, %c1_181, %c0_182] : memref<4x16x16xf32, #tpu.memory_space<vmem>>, vector<1x15x16xf32>
    %218 = vector.shape_cast %217 : vector<1x15x16xf32> to vector<15x16xf32>
    %c3_183 = arith.constant 3 : index
    %c1_184 = arith.constant 1 : index
    %219 = memref.load %arg5[%c3_183, %c1_184] : memref<4x4xf32, #tpu.memory_space<smem>>
    %220 = vector.broadcast %219 : f32 to vector<15x16xf32>
    %221 = arith.mulf %220, %216 : vector<15x16xf32>
    %c3_185 = arith.constant 3 : index
    %c1_186 = arith.constant 1 : index
    %222 = memref.load %arg6[%c3_185, %c1_186] : memref<4x4xf32, #tpu.memory_space<smem>>
    %223 = vector.broadcast %222 : f32 to vector<15x16xf32>
    %224 = arith.mulf %223, %218 : vector<15x16xf32>
    %225 = arith.addf %221, %224 : vector<15x16xf32>
    %226 = arith.addf %214, %225 : vector<15x16xf32>
    %c2_187 = arith.constant 2 : index
    %c0_188 = arith.constant 0 : index
    %c0_189 = arith.constant 0 : index
    %227 = vector.load %arg9[%c2_187, %c0_188, %c0_189] : memref<4x16x16xf32, #tpu.memory_space<vmem>>, vector<1x15x16xf32>
    %228 = vector.shape_cast %227 : vector<1x15x16xf32> to vector<15x16xf32>
    %c2_190 = arith.constant 2 : index
    %c1_191 = arith.constant 1 : index
    %c0_192 = arith.constant 0 : index
    %229 = vector.load %arg9[%c2_190, %c1_191, %c0_192] : memref<4x16x16xf32, #tpu.memory_space<vmem>>, vector<1x15x16xf32>
    %230 = vector.shape_cast %229 : vector<1x15x16xf32> to vector<15x16xf32>
    %c3_193 = arith.constant 3 : index
    %c2_194 = arith.constant 2 : index
    %231 = memref.load %arg5[%c3_193, %c2_194] : memref<4x4xf32, #tpu.memory_space<smem>>
    %232 = vector.broadcast %231 : f32 to vector<15x16xf32>
    %233 = arith.mulf %232, %228 : vector<15x16xf32>
    %c3_195 = arith.constant 3 : index
    %c2_196 = arith.constant 2 : index
    %234 = memref.load %arg6[%c3_195, %c2_196] : memref<4x4xf32, #tpu.memory_space<smem>>
    %235 = vector.broadcast %234 : f32 to vector<15x16xf32>
    %236 = arith.mulf %235, %230 : vector<15x16xf32>
    %237 = arith.addf %233, %236 : vector<15x16xf32>
    %238 = arith.addf %226, %237 : vector<15x16xf32>
    %c3_197 = arith.constant 3 : index
    %c0_198 = arith.constant 0 : index
    %c0_199 = arith.constant 0 : index
    %239 = vector.load %arg9[%c3_197, %c0_198, %c0_199] : memref<4x16x16xf32, #tpu.memory_space<vmem>>, vector<1x15x16xf32>
    %240 = vector.shape_cast %239 : vector<1x15x16xf32> to vector<15x16xf32>
    %c3_200 = arith.constant 3 : index
    %c1_201 = arith.constant 1 : index
    %c0_202 = arith.constant 0 : index
    %241 = vector.load %arg9[%c3_200, %c1_201, %c0_202] : memref<4x16x16xf32, #tpu.memory_space<vmem>>, vector<1x15x16xf32>
    %242 = vector.shape_cast %241 : vector<1x15x16xf32> to vector<15x16xf32>
    %c3_203 = arith.constant 3 : index
    %c3_204 = arith.constant 3 : index
    %243 = memref.load %arg5[%c3_203, %c3_204] : memref<4x4xf32, #tpu.memory_space<smem>>
    %244 = vector.broadcast %243 : f32 to vector<15x16xf32>
    %245 = arith.mulf %244, %240 : vector<15x16xf32>
    %c3_205 = arith.constant 3 : index
    %c3_206 = arith.constant 3 : index
    %246 = memref.load %arg6[%c3_205, %c3_206] : memref<4x4xf32, #tpu.memory_space<smem>>
    %247 = vector.broadcast %246 : f32 to vector<15x16xf32>
    %248 = arith.mulf %247, %242 : vector<15x16xf32>
    %249 = arith.addf %245, %248 : vector<15x16xf32>
    %250 = arith.addf %238, %249 : vector<15x16xf32>
    %c3_207 = arith.constant 3 : index
    %251 = memref.load %arg7[%c3_207] : memref<4xf32, #tpu.memory_space<smem>>
    %252 = vector.broadcast %251 : f32 to vector<15x16xf32>
    %253 = arith.addf %250, %252 : vector<15x16xf32>
    %cst_208 = arith.constant 0.000000e+00 : f32
    %254 = vector.broadcast %cst_208 : f32 to vector<15x16xf32>
    %255 = arith.maximumf %253, %254 : vector<15x16xf32>
    %c0_209 = arith.constant 0 : index
    %c3_210 = arith.constant 3 : index
    %c0_211 = arith.constant 0 : index
    %c0_212 = arith.constant 0 : index
    %256 = vector.load %arg4[%c0_209, %c3_210, %c0_211, %c0_212] : memref<1x4x15x16xf32, #tpu.memory_space<vmem>>, vector<1x1x15x16xf32>
    %257 = vector.shape_cast %256 : vector<1x1x15x16xf32> to vector<15x16xf32>
    %cst_213 = arith.constant 5.000000e-01 : f32
    %258 = vector.broadcast %cst_213 : f32 to vector<15x16xf32>
    %259 = arith.mulf %258, %257 : vector<15x16xf32>
    %cst_214 = arith.constant 0.707106769 : f32
    %260 = vector.broadcast %cst_214 : f32 to vector<15x16xf32>
    %261 = arith.mulf %257, %260 : vector<15x16xf32>
    %262 = math.erf %261 : vector<15x16xf32>
    %cst_215 = arith.constant 1.000000e+00 : f32
    %263 = vector.broadcast %cst_215 : f32 to vector<15x16xf32>
    %264 = arith.addf %263, %262 : vector<15x16xf32>
    %265 = arith.mulf %259, %264 : vector<15x16xf32>
    %266 = arith.subf %265, %255 : vector<15x16xf32>
    %c0_216 = arith.constant 0 : index
    %c3_217 = arith.constant 3 : index
    %c0_218 = arith.constant 0 : index
    %c0_219 = arith.constant 0 : index
    %267 = vector.load %arg8[%c0_216, %c3_217, %c0_218, %c0_219] : memref<1x4x15x16xf32, #tpu.memory_space<vmem>>, vector<1x1x15x16xf32>
    %268 = vector.shape_cast %267 : vector<1x1x15x16xf32> to vector<15x16xf32>
    %269 = vector.shape_cast %266 : vector<15x16xf32> to vector<1x1x15x16xf32>
    tpu.vector_store %arg8[%c0_216, %c3_217, %c0_218, %c0_219], %269 {strides = array<i32>} : memref<1x4x15x16xf32, #tpu.memory_space<vmem>>, vector<1x1x15x16xf32>,
    return
  }
  func.func @transform_0(%arg0: i32, %arg1: i32) -> (i32, i32, i32, i32) {
    %c0_i32 = arith.constant 0 : i32
    %c0_i32_0 = arith.constant 0 : i32
    %c0_i32_1 = arith.constant 0 : i32
    return %arg0, %c0_i32, %c0_i32_0, %arg1 : i32, i32, i32, i32
  }
  func.func @transform_1(%arg0: i32, %arg1: i32) -> (i32, i32, i32, i32) {
    %c0_i32 = arith.constant 0 : i32
    %c0_i32_0 = arith.constant 0 : i32
    %c0_i32_1 = arith.constant 0 : i32
    return %arg0, %c0_i32, %c0_i32_0, %arg1 : i32, i32, i32, i32
  }
  func.func @transform_2(%arg0: i32, %arg1: i32) -> (i32, i32, i32, i32) {
    %c0_i32 = arith.constant 0 : i32
    %c0_i32_0 = arith.constant 0 : i32
    %c0_i32_1 = arith.constant 0 : i32
    return %arg0, %c0_i32, %c0_i32_0, %arg1 : i32, i32, i32, i32
  }
  func.func @transform_3(%arg0: i32, %arg1: i32) -> (i32, i32) {
    %c0_i32 = arith.constant 0 : i32
    %c0_i32_0 = arith.constant 0 : i32
    %c0_i32_1 = arith.constant 0 : i32
    return %c0_i32, %c0_i32_0 : i32, i32
  }
  func.func @transform_4(%arg0: i32, %arg1: i32) -> (i32, i32) {
    %c0_i32 = arith.constant 0 : i32
    %c0_i32_0 = arith.constant 0 : i32
    %c0_i32_1 = arith.constant 0 : i32
    return %c0_i32, %c0_i32_0 : i32, i32
  }
  func.func @transform_5(%arg0: i32, %arg1: i32) -> i32 {
    %c0_i32 = arith.constant 0 : i32
    %c0_i32_0 = arith.constant 0 : i32
    return %c0_i32 : i32
  }
  func.func @transform_6(%arg0: i32, %arg1: i32) -> (i32, i32, i32, i32) {
    %c0_i32 = arith.constant 0 : i32
    %c0_i32_0 = arith.constant 0 : i32
    %c0_i32_1 = arith.constant 0 : i32
    return %arg0, %c0_i32, %c0_i32_0, %arg1 : i32, i32, i32, i32
  }
}

</mosaic_0001>

<llo_original>
// kernel: tpu_custom_call.1
$region0: #{tpu_custom_call.1}
  #allocation0 [shape = 'u32[]', space=smem, size = 0x4, offset = 0x4, fixed_abs, tag = 'smem constant byte address 0x4 - core index']
  #allocation1 [shape = 'u32[144,128]{1,0:T(1,128)}', space=vmem, size = 0x12000, scoped, tag = 'internal scratch']
  #allocation2 [shape = 'f32[4,16,16]{2,1,0:T(8,128)}', space=vmem, size = 0x8000, scoped, tag = 'scratch operand']
  %s0 = inlined_call_operand.vmem [shape: f32[2,4,8,16], index: 0, kind: input, shape index: {}]
  %s1 = inlined_call_operand.vmem [shape: f32[2,4,8,16], index: 1, kind: input, shape index: {}]
  %s2 = inlined_call_operand.vmem [shape: f32[2,4,15,16], index: 2, kind: input, shape index: {}]
  %s3 = inlined_call_operand.vmem [shape: f32[4,4], index: 3, kind: input, shape index: {}]
  %s4 = inlined_call_operand.vmem [shape: f32[4,4], index: 4, kind: input, shape index: {}]
  %s5 = inlined_call_operand.vmem [shape: f32[4], index: 5, kind: input, shape index: {}]
  %s6 = inlined_call_operand.vmem [shape: f32[2,4,15,16], index: 6, kind: output, shape index: {}]
  %s7 = sld [smem:[#allocation0]]
  $region69: #{tpu_custom_call.1} parent=0
    _
  %s9 = ssub.s32 1, %s7
  %s10 = scalar_select 0, %s9, %s7
  $region1: #{tpu_custom_call.1} parent=0
    #allocation3 [shape = 'u8[2048]{0}', space=smem, size = 0x800, scoped, tag = 'input window, operand 3, single buffered']
    #allocation4 [shape = 's32[2]{0}', space=sflag, size = 0x8, scoped, tag = 'scoped memory for tpu_custom_call.1']
    #allocation5 [shape = 'u8[2048]{0}', space=smem, size = 0x800, scoped, tag = 'input window, operand 4, single buffered']
    #allocation6 [shape = 's32[1]{0}', space=sflag, size = 0x4, scoped, tag = 'scoped memory for tpu_custom_call.1']
    #allocation7 [shape = 'u8[512]{0}', space=smem, size = 0x200, scoped, tag = 'input window, operand 5, single buffered']
    %11 = vsyncpa [#allocation4], 0
    %12 = vsyncpa [#allocation6], 0
    loop: start=0, step=1, limit=4
    $region2: #{tpu_custom_call.1} parent=1 // loop_pre_header
      _
    $region3: #{tpu_custom_call.1} parent=1 // loop_header
      %s14 = sphi 0, %s18
      %p15 = scmp.ge.s32.totalorder %s14, 4
      %s21 = sphi 0, %s33
      %s22 = sphi 0, %s29
      %s23 = sphi 0, %s21
      %s24 = sphi 0, %s22
      %s25 = sphi 0, %s23
      %s26 = sphi 0, %s24
      %s38 = sphi 0, %s40
      %s41 = sphi 0, %s38
      %s42 = sphi 0, %s41
      %s58 = sphi 0, %s42
      %s66 = sphi 0, %s68
      %s69 = sphi 0, %s66
      %s70 = sphi 0, %s69
      %s86 = sphi 0, %s70
      %s94 = sphi 0, %s96
      %s97 = sphi 0, %s94
      %s98 = sphi 0, %s97
      %s114 = sphi 0, %s98
      %s118 = sphi 0, %s118
      %s120 = sphi 0, %s118
      %s121 = sphi 0, %s120
      %s135 = sphi 0, %s121
      %s139 = sphi 0, %s139
      %s141 = sphi 0, %s139
      %s142 = sphi 0, %s141
      %s156 = sphi 0, %s142
      %s160 = sphi 0, %s160
      %s162 = sphi 0, %s160
      %s163 = sphi 0, %s162
      %s177 = sphi 0, %s163
      %s185 = sphi 0, %s187
      %s188 = sphi 0, %s185
      %s189 = sphi 0, %s188
      %s205 = sphi 0, %s189
    $region4: #{tpu_custom_call.1} parent=1 // loop_header_branch
      %17 = sbr.rel (%p15) target = $region8
    $region5: #{tpu_custom_call.1} parent=1 // loop_body
      %s19 = ssub.s32 %s14, 1
      %s20 = ssub.s32 %s14, 2
      %s27 = sadd.s32 1, %s22
      %p28 = scmp.ge.s32.totalorder %s27, 1
      %s29 = scalar_select %p28, 0, %s27
      %s30 = sadd.s32 1, %s21
      %s31 = scalar_select %p28, %s30, %s21
      %p32 = scmp.ge.s32.totalorder %s31, 2
      %s33 = scalar_select %p32, 0, %s31
      %s34 = ssub.s32 %s21, %s33
      %s35 = ssub.s32 %s22, %s29
      %s36 = sor.u32 %s34, %s35
      %p37 = scmp.eq.s32.totalorder %s36, 0
      %s39 = sadd.s32 %s38, 1
      %s40 = scalar_select %p37, %s38, %s39
      %p43 = pneg %p37
      %p44 = scmp.eq.s32.totalorder %s14, 1
      %p45 = por %p43, %p44
      %p46 = scmp.ne.s32.totalorder %s38, %s41
      %p47 = scmp.eq.s32.totalorder %s14, 0
      %p48 = por %p46, %p47
      %p49 = scmp.ne.s32.totalorder %s38, %s41
      %p50 = scmp.eq.s32.totalorder %s19, 1
      %p51 = por %p49, %p50
      %p52 = scmp.ne.s32.totalorder %s41, %s42
      %p53 = scmp.eq.s32.totalorder %s19, 0
      %p54 = por %p52, %p53
      %p55 = scmp.ne.s32.totalorder %s41, %s42
      %p56 = scmp.eq.s32.totalorder %s20, 1
      %p57 = por %p55, %p56
      %p59 = scmp.ne.s32.totalorder %s42, %s58
      %p60 = scmp.eq.s32.totalorder %s20, 0
      %p61 = por %p59, %p60
      %s62 = ssub.s32 %s21, %s33
      %s63 = ssub.s32 %s22, %s29
      %s64 = sor.u32 %s62, %s63
      %p65 = scmp.eq.s32.totalorder %s64, 0
      %s67 = sadd.s32 %s66, 1
      %s68 = scalar_select %p65, %s66, %s67
      %p71 = pneg %p65
      %p72 = scmp.eq.s32.totalorder %s14, 1
      %p73 = por %p71, %p72
      %p74 = scmp.ne.s32.totalorder %s66, %s69
      %p75 = scmp.eq.s32.totalorder %s14, 0
      %p76 = por %p74, %p75
      %p77 = scmp.ne.s32.totalorder %s66, %s69
      %p78 = scmp.eq.s32.totalorder %s19, 1
      %p79 = por %p77, %p78
      %p80 = scmp.ne.s32.totalorder %s69, %s70
      %p81 = scmp.eq.s32.totalorder %s19, 0
      %p82 = por %p80, %p81
      %p83 = scmp.ne.s32.totalorder %s69, %s70
      %p84 = scmp.eq.s32.totalorder %s20, 1
      %p85 = por %p83, %p84
      %p87 = scmp.ne.s32.totalorder %s70, %s86
      %p88 = scmp.eq.s32.totalorder %s20, 0
      %p89 = por %p87, %p88
      %s90 = ssub.s32 %s21, %s33
      %s91 = ssub.s32 %s22, %s29
      %s92 = sor.u32 %s90, %s91
      %p93 = scmp.eq.s32.totalorder %s92, 0
      %s95 = sadd.s32 %s94, 1
      %s96 = scalar_select %p93, %s94, %s95
      %p99 = pneg %p93
      %p100 = scmp.eq.s32.totalorder %s14, 1
      %p101 = por %p99, %p100
      %p102 = scmp.ne.s32.totalorder %s94, %s97
      %p103 = scmp.eq.s32.totalorder %s14, 0
      %p104 = por %p102, %p103
      %p105 = scmp.ne.s32.totalorder %s94, %s97
      %p106 = scmp.eq.s32.totalorder %s19, 1
      %p107 = por %p105, %p106
      %p108 = scmp.ne.s32.totalorder %s97, %s98
      %p109 = scmp.eq.s32.totalorder %s19, 0
      %p110 = por %p108, %p109
      %p111 = scmp.ne.s32.totalorder %s97, %s98
      %p112 = scmp.eq.s32.totalorder %s20, 1
      %p113 = por %p111, %p112
      %p115 = scmp.ne.s32.totalorder %s98, %s114
      %p116 = scmp.eq.s32.totalorder %s20, 0
      %p117 = por %p115, %p116
      %s119 = sadd.s32 %s118, 1
      %p122 = scmp.eq.s32.totalorder %s14, 1
      %p123 = scmp.ne.s32.totalorder %s118, %s120
      %p124 = scmp.eq.s32.totalorder %s14, 0
      %p125 = por %p123, %p124
      %p126 = scmp.ne.s32.totalorder %s118, %s120
      %p127 = scmp.eq.s32.totalorder %s19, 1
      %p128 = por %p126, %p127
      %p129 = scmp.ne.s32.totalorder %s120, %s121
      %p130 = scmp.eq.s32.totalorder %s19, 0
      %p131 = por %p129, %p130
      %p132 = scmp.ne.s32.totalorder %s120, %s121
      %p133 = scmp.eq.s32.totalorder %s20, 1
      %p134 = por %p132, %p133
      %p136 = scmp.ne.s32.totalorder %s121, %s135
      %p137 = scmp.eq.s32.totalorder %s20, 0
      %p138 = por %p136, %p137
      %s140 = sadd.s32 %s139, 1
      %p143 = scmp.eq.s32.totalorder %s14, 1
      %p144 = scmp.ne.s32.totalorder %s139, %s141
      %p145 = scmp.eq.s32.totalorder %s14, 0
      %p146 = por %p144, %p145
      %p147 = scmp.ne.s32.totalorder %s139, %s141
      %p148 = scmp.eq.s32.totalorder %s19, 1
      %p149 = por %p147, %p148
      %p150 = scmp.ne.s32.totalorder %s141, %s142
      %p151 = scmp.eq.s32.totalorder %s19, 0
      %p152 = por %p150, %p151
      %p153 = scmp.ne.s32.totalorder %s141, %s142
      %p154 = scmp.eq.s32.totalorder %s20, 1
      %p155 = por %p153, %p154
      %p157 = scmp.ne.s32.totalorder %s142, %s156
      %p158 = scmp.eq.s32.totalorder %s20, 0
      %p159 = por %p157, %p158
      %s161 = sadd.s32 %s160, 1
      %p164 = scmp.eq.s32.totalorder %s14, 1
      %p165 = scmp.ne.s32.totalorder %s160, %s162
      %p166 = scmp.eq.s32.totalorder %s14, 0
      %p167 = por %p165, %p166
      %p168 = scmp.ne.s32.totalorder %s160, %s162
      %p169 = scmp.eq.s32.totalorder %s19, 1
      %p170 = por %p168, %p169
      %p171 = scmp.ne.s32.totalorder %s162, %s163
      %p172 = scmp.eq.s32.totalorder %s19, 0
      %p173 = por %p171, %p172
      %p174 = scmp.ne.s32.totalorder %s162, %s163
      %p175 = scmp.eq.s32.totalorder %s20, 1
      %p176 = por %p174, %p175
      %p178 = scmp.ne.s32.totalorder %s163, %s177
      %p179 = scmp.eq.s32.totalorder %s20, 0
      %p180 = por %p178, %p179
      %s181 = ssub.s32 %s21, %s33
      %s182 = ssub.s32 %s22, %s29
      %s183 = sor.u32 %s181, %s182
      %p184 = scmp.eq.s32.totalorder %s183, 0
      %s186 = sadd.s32 %s185, 1
      %s187 = scalar_select %p184, %s185, %s186
      %p190 = pneg %p184
      %p191 = scmp.eq.s32.totalorder %s14, 1
      %p192 = por %p190, %p191
      %p193 = scmp.ne.s32.totalorder %s185, %s188
      %p194 = scmp.eq.s32.totalorder %s14, 0
      %p195 = por %p193, %p194
      %p196 = scmp.ne.s32.totalorder %s185, %s188
      %p197 = scmp.eq.s32.totalorder %s19, 1
      %p198 = por %p196, %p197
      %p199 = scmp.ne.s32.totalorder %s188, %s189
      %p200 = scmp.eq.s32.totalorder %s19, 0
      %p201 = por %p199, %p200
      %p202 = scmp.ne.s32.totalorder %s188, %s189
      %p203 = scmp.eq.s32.totalorder %s20, 1
      %p204 = por %p202, %p203
      %p206 = scmp.ne.s32.totalorder %s189, %s205
      %p207 = scmp.eq.s32.totalorder %s20, 0
      %p208 = por %p206, %p207
      %p209 = scmp.le.s32.totalorder 1, %s14
      %p210 = scmp.lt.s32.totalorder %s14, 3
      %p211 = pnand %p209, %p210
      %p212 = pneg %p211
      // Predicated region
      $region9: #{tpu_custom_call.1} parent=5 // pred_check
        _
      $region10: #{tpu_custom_call.1} parent=5 // pred_check_branch
        %214 = sbr.rel (%p211) target = $region12
      $region11: #{tpu_custom_call.1} parent=5 // pred_region
        %s215 = ssub.s32 %s14, 1
        // Predicated region
        $region13: #{tpu_custom_call.1} parent=11 // pred_check
          %p216 = pneg %p131
        $region14: #{tpu_custom_call.1} parent=11 // pred_check_branch
          %218 = sbr.rel (%p216) target = $region16
        $region15: #{tpu_custom_call.1} parent=11 // pred_region
          %s220 = ssub.s32 64, 64
          %221 = vsyncadd [#allocation4], %s220
          %s223 = sshll.u32 %s3, 4
          %s224 = int_to_ptr.vmem [resolvable:$true] %s223
          %226 = dma.vmem_to_smem %s224, 64, [#allocation3], [#allocation4]
        $region16: #{tpu_custom_call.1} parent=11 // pred_fallthru
          _
        // Predicated region
        $region17: #{tpu_custom_call.1} parent=11 // pred_check
          %p227 = pneg %p152
        $region18: #{tpu_custom_call.1} parent=11 // pred_check_branch
          %229 = sbr.rel (%p227) target = $region20
        $region19: #{tpu_custom_call.1} parent=11 // pred_region
          %s231 = ssub.s32 64, 64
          %232 = vsyncadd [#allocation6], %s231
          %s234 = sshll.u32 %s4, 4
          %s235 = int_to_ptr.vmem [resolvable:$true] %s234
          %237 = dma.vmem_to_smem %s235, 64, [#allocation5], [#allocation6]
        $region20: #{tpu_custom_call.1} parent=11 // pred_fallthru
          _
        // Predicated region
        $region21: #{tpu_custom_call.1} parent=11 // pred_check
          %p238 = pneg %p173
        $region22: #{tpu_custom_call.1} parent=11 // pred_check_branch
          %240 = sbr.rel (%p238) target = $region24
        $region23: #{tpu_custom_call.1} parent=11 // pred_region
          %s242 = ssub.s32 16, 16
          %243 = vsyncadd [#allocation6], %s242
          %s245 = sshll.u32 %s5, 4
          %s246 = int_to_ptr.vmem [resolvable:$true] %s245
          %248 = dma.vmem_to_smem %s246, 16, [#allocation7], [#allocation6]
        $region24: #{tpu_custom_call.1} parent=11 // pred_fallthru
          _
      $region12: #{tpu_custom_call.1} parent=5 // pred_fallthru
        _
      %p249 = scmp.lt.s32.totalorder %s14, 2
      // Predicated region
      $region25: #{tpu_custom_call.1} parent=5 // pred_check
        %p250 = pneg %p249
      $region26: #{tpu_custom_call.1} parent=5 // pred_check_branch
        %252 = sbr.rel (%p250) target = $region28
      $region27: #{tpu_custom_call.1} parent=5 // pred_region
        // Predicated region
        $region29: #{tpu_custom_call.1} parent=27 // pred_check
          %p253 = pneg %p48
        $region30: #{tpu_custom_call.1} parent=27 // pred_check_branch
          %255 = sbr.rel (%p253) target = $region32
        $region31: #{tpu_custom_call.1} parent=27 // pred_region
          %p256 = scmp.lt.s32.totalorder %s21, 1
          %s257 = scalar_select %p256, %s21, 1
          %p258 = scmp.lt.s32.totalorder %s22, 0
          %s259 = scalar_select %p258, %s22, 0
          %s260 = smul.addr %s257, 4
          %s261 = sadd.s32 %s259, %s260
          %s262 = smul.addr %s261, 8
          %s263 = scalar_lea.vmem %s0, %s262
        $region32: #{tpu_custom_call.1} parent=27 // pred_fallthru
          _
        // Predicated region
        $region33: #{tpu_custom_call.1} parent=27 // pred_check
          %p264 = pneg %p76
        $region34: #{tpu_custom_call.1} parent=27 // pred_check_branch
          %266 = sbr.rel (%p264) target = $region36
        $region35: #{tpu_custom_call.1} parent=27 // pred_region
          %p267 = scmp.lt.s32.totalorder %s21, 1
          %s268 = scalar_select %p267, %s21, 1
          %p269 = scmp.lt.s32.totalorder %s22, 0
          %s270 = scalar_select %p269, %s22, 0
          %s271 = smul.addr %s268, 4
          %s272 = sadd.s32 %s270, %s271
          %s273 = smul.addr %s272, 8
          %s274 = scalar_lea.vmem %s1, %s273
        $region36: #{tpu_custom_call.1} parent=27 // pred_fallthru
          _
        // Predicated region
        $region37: #{tpu_custom_call.1} parent=27 // pred_check
          %p275 = pneg %p104
        $region38: #{tpu_custom_call.1} parent=27 // pred_check_branch
          %277 = sbr.rel (%p275) target = $region40
        $region39: #{tpu_custom_call.1} parent=27 // pred_region
          %p278 = scmp.lt.s32.totalorder %s21, 1
          %s279 = scalar_select %p278, %s21, 1
          %p280 = scmp.lt.s32.totalorder %s22, 0
          %s281 = scalar_select %p280, %s22, 0
          %s282 = smul.addr %s279, 8
          %s283 = sadd.s32 %s281, %s282
          %s284 = smul.addr %s283, 8
          %s285 = scalar_lea.vmem %s2, %s284
        $region40: #{tpu_custom_call.1} parent=27 // pred_fallthru
          _
      $region28: #{tpu_custom_call.1} parent=5 // pred_fallthru
        _
      %p286 = scmp.le.s32.totalorder 1, %s14
      %p287 = scmp.lt.s32.totalorder %s14, 3
      %p288 = pnand %p286, %p287
      %p289 = pneg %p288
      // Predicated region
      $region41: #{tpu_custom_call.1} parent=5 // pred_check
        _
      $region42: #{tpu_custom_call.1} parent=5 // pred_check_branch
        %291 = sbr.rel (%p288) target = $region44
      $region43: #{tpu_custom_call.1} parent=5 // pred_region
        %s292 = ssub.s32 %s14, 1
        // Predicated region
        $region45: #{tpu_custom_call.1} parent=43 // pred_check
          %p293 = pneg %p131
        $region46: #{tpu_custom_call.1} parent=43 // pred_check_branch
          %295 = sbr.rel (%p293) target = $region48
        $region47: #{tpu_custom_call.1} parent=43 // pred_region
          %296 = dma.done [#allocation4], 64
        $region48: #{tpu_custom_call.1} parent=43 // pred_fallthru
          _
        // Predicated region
        $region49: #{tpu_custom_call.1} parent=43 // pred_check
          %p297 = pneg %p152
        $region50: #{tpu_custom_call.1} parent=43 // pred_check_branch
          %299 = sbr.rel (%p297) target = $region52
        $region51: #{tpu_custom_call.1} parent=43 // pred_region
          %300 = dma.done [#allocation6], 64
        $region52: #{tpu_custom_call.1} parent=43 // pred_fallthru
          _
        // Predicated region
        $region53: #{tpu_custom_call.1} parent=43 // pred_check
          %p301 = pneg %p173
        $region54: #{tpu_custom_call.1} parent=43 // pred_check_branch
          %303 = sbr.rel (%p301) target = $region56
        $region55: #{tpu_custom_call.1} parent=43 // pred_region
          %304 = dma.done [#allocation6], 16
        $region56: #{tpu_custom_call.1} parent=43 // pred_fallthru
          _
        %305 = sfence
        %p306 = scmp.lt.s32.totalorder %s23, 1
        %s307 = scalar_select %p306, %s23, 1
        %p308 = scmp.lt.s32.totalorder %s24, 0
        %s309 = scalar_select %p308, %s24, 0
        %s310 = smul.addr %s307, 4
        %s311 = sadd.s32 %s309, %s310
        %s312 = smul.addr %s311, 8
        %s313 = scalar_lea.vmem %s0, %s312
        %p314 = pneg %p54
        %p315 = pneg %p51
        %p316 = scmp.lt.s32.totalorder %s23, 1
        %s317 = scalar_select %p316, %s23, 1
        %p318 = scmp.lt.s32.totalorder %s24, 0
        %s319 = scalar_select %p318, %s24, 0
        %s320 = smul.addr %s317, 4
        %s321 = sadd.s32 %s319, %s320
        %s322 = smul.addr %s321, 8
        %s323 = scalar_lea.vmem %s1, %s322
        %p324 = pneg %p82
        %p325 = pneg %p79
        %p326 = scmp.lt.s32.totalorder %s23, 1
        %s327 = scalar_select %p326, %s23, 1
        %p328 = scmp.lt.s32.totalorder %s24, 0
        %s329 = scalar_select %p328, %s24, 0
        %s330 = smul.addr %s327, 8
        %s331 = sadd.s32 %s329, %s330
        %s332 = smul.addr %s331, 8
        %s333 = scalar_lea.vmem %s2, %s332
        %p334 = pneg %p110
        %p335 = pneg %p107
        %p336 = pneg %p131
        %p337 = pneg %p128
        %p338 = pneg %p152
        %p339 = pneg %p149
        %p340 = pneg %p173
        %p341 = pneg %p170
        %p342 = pneg %p201
        %p343 = pneg %p198
        %p344 = scmp.lt.s32.totalorder %s23, 1
        %s345 = scalar_select %p344, %s23, 1
        %p346 = scmp.lt.s32.totalorder %s24, 0
        %s347 = scalar_select %p346, %s24, 0
        %s348 = smul.addr %s345, 8
        %s349 = sadd.s32 %s347, %s348
        %s350 = smul.addr %s349, 8
        %s351 = scalar_lea.vmem %s6, %s350
        %p352 = scmp.lt.s32.totalorder %s23, 1
        %s353 = scalar_select %p352, %s23, 1
        %p354 = scmp.lt.s32.totalorder %s24, 0
        %s355 = scalar_select %p354, %s24, 0
        %s356 = smul.addr %s353, 4
        %s357 = sadd.s32 %s355, %s356
        %s358 = smul.addr %s357, 8
        %s359 = scalar_lea.vmem %s0, %s358
        %p360 = scmp.lt.s32.totalorder %s23, 1
        %s361 = scalar_select %p360, %s23, 1
        %p362 = scmp.lt.s32.totalorder %s24, 0
        %s363 = scalar_select %p362, %s24, 0
        %s364 = smul.addr %s361, 4
        %s365 = sadd.s32 %s363, %s364
        %s366 = smul.addr %s365, 8
        %s367 = scalar_lea.vmem %s1, %s366
        %p368 = scmp.lt.s32.totalorder %s23, 1
        %s369 = scalar_select %p368, %s23, 1
        %p370 = scmp.lt.s32.totalorder %s24, 0
        %s371 = scalar_select %p370, %s24, 0
        %s372 = smul.addr %s369, 8
        %s373 = sadd.s32 %s371, %s372
        %s374 = smul.addr %s373, 8
        %s375 = scalar_lea.vmem %s2, %s374
        %p376 = scmp.lt.s32.totalorder %s23, 1
        %s377 = scalar_select %p376, %s23, 1
        %p378 = scmp.lt.s32.totalorder %s24, 0
        %s379 = scalar_select %p378, %s24, 0
        %s380 = smul.addr %s377, 8
        %s381 = sadd.s32 %s379, %s380
        %s382 = smul.addr %s381, 8
        %s383 = scalar_lea.vmem %s6, %s382
        %v384 = vld [vmem:[%s359] sm:$0xff]
        %v385 = vld [vmem:[%s359 + $0x8] sm:$0xff]
        %v386 = vld [vmem:[%s359 + $0x10] sm:$0xff]
        %v387 = vld [vmem:[%s359 + $0x18] sm:$0xff]
        %vm388 = vcmask 130048
        %389 = vst.msk [vmem:[#allocation2] sm:$0xff] %vm388, %v384
        %390 = vst.msk [vmem:[#allocation2 + $0x10] sm:$0xff] %vm388, %v385
        %391 = vst.msk [vmem:[#allocation2 + $0x20] sm:$0xff] %vm388, %v386
        %392 = vst.msk [vmem:[#allocation2 + $0x30] sm:$0xff] %vm388, %v387
        %v393 = vld [vmem:[%s367] sm:$0xff]
        %v394 = vld [vmem:[%s367 + $0x8] sm:$0xff]
        %v395 = vld [vmem:[%s367 + $0x10] sm:$0xff]
        %v396 = vld [vmem:[%s367 + $0x18] sm:$0xff]
        %397 = vst.msk [vmem:[#allocation2 + $0x8] sm:$0xff] %vm388, %v393
        %398 = vst.msk [vmem:[#allocation2 + $0x18] sm:$0xff] %vm388, %v394
        %399 = vst.msk [vmem:[#allocation2 + $0x28] sm:$0xff] %vm388, %v395
        %400 = vst.msk [vmem:[#allocation2 + $0x38] sm:$0xff] %vm388, %v396
        %v401 = vld [vmem:[#allocation2] sm:$0xff]
        %v402 = vld [vmem:[#allocation2 + $0x8] sm:$0x7f]
        %v403 = vld [vmem:[#allocation2 + $0x1] sm:$0xff]
        %v404 = vld [vmem:[#allocation2 + $0x9] sm:$0x7f]
        %s405 = sld [smem:[#allocation3]]
        %v406 = vstv %s405
        %v407 = vmul.f32 %v406, %v401
        %v408 = vmul.f32 %v406, %v402
        %s409 = sld [smem:[#allocation5]]
        %v410 = vstv %s409
        %v411 = vmul.f32 %v410, %v403
        %v412 = vmul.f32 %v410, %v404
        %v413 = vadd.f32 %v407, %v411
        %v414 = vadd.f32 %v408, %v412
        %s415 = scalar_lea.vmem [#allocation2], 16
        %v416 = vld [vmem:[%s415] sm:$0xff]
        %v417 = vld [vmem:[%s415 + $0x8] sm:$0x7f]
        %v418 = vld [vmem:[%s415 + $0x1] sm:$0xff]
        %v419 = vld [vmem:[%s415 + $0x9] sm:$0x7f]
        %s420 = sld [smem:[#allocation3 + $0x1]]
        %v421 = vstv %s420
        %v422 = vmul.f32 %v421, %v416
        %v423 = vmul.f32 %v421, %v417
        %s424 = sld [smem:[#allocation5 + $0x1]]
        %v425 = vstv %s424
        %v426 = vmul.f32 %v425, %v418
        %v427 = vmul.f32 %v425, %v419
        %v428 = vadd.f32 %v422, %v426
        %v429 = vadd.f32 %v423, %v427
        %v430 = vadd.f32 %v413, %v428
        %v431 = vadd.f32 %v414, %v429
        %s432 = scalar_lea.vmem [#allocation2], 32
        %v433 = vld [vmem:[%s432] sm:$0xff]
        %v434 = vld [vmem:[%s432 + $0x8] sm:$0x7f]
        %v435 = vld [vmem:[%s432 + $0x1] sm:$0xff]
        %v436 = vld [vmem:[%s432 + $0x9] sm:$0x7f]
        %s437 = sld [smem:[#allocation3 + $0x2]]
        %v438 = vstv %s437
        %v439 = vmul.f32 %v438, %v433
        %v440 = vmul.f32 %v438, %v434
        %s441 = sld [smem:[#allocation5 + $0x2]]
        %v442 = vstv %s441
        %v443 = vmul.f32 %v442, %v435
        %v444 = vmul.f32 %v442, %v436
        %v445 = vadd.f32 %v439, %v443
        %v446 = vadd.f32 %v440, %v444
        %v447 = vadd.f32 %v430, %v445
        %v448 = vadd.f32 %v431, %v446
        %s449 = scalar_lea.vmem [#allocation2], 48
        %v450 = vld [vmem:[%s449] sm:$0xff]
        %v451 = vld [vmem:[%s449 + $0x8] sm:$0x7f]
        %v452 = vld [vmem:[%s449 + $0x1] sm:$0xff]
        %v453 = vld [vmem:[%s449 + $0x9] sm:$0x7f]
        %s454 = sld [smem:[#allocation3 + $0x3]]
        %v455 = vstv %s454
        %v456 = vmul.f32 %v455, %v450
        %v457 = vmul.f32 %v455, %v451
        %s458 = sld [smem:[#allocation5 + $0x3]]
        %v459 = vstv %s458
        %v460 = vmul.f32 %v459, %v452
        %v461 = vmul.f32 %v459, %v453
        %v462 = vadd.f32 %v456, %v460
        %v463 = vadd.f32 %v457, %v461
        %v464 = vadd.f32 %v447, %v462
        %v465 = vadd.f32 %v448, %v463
        %s466 = sld [smem:[#allocation7]]
        %v467 = vstv %s466
        %v468 = vadd.f32 %v464, %v467
        %v469 = vadd.f32 %v465, %v467
        %v470 = vmax.f32 %v468, 0.0
        %v471 = vmax.f32 %v469, 0.0
        %v472 = vld [vmem:[%s375] sm:$0xff]
        %v473 = vld [vmem:[%s375 + $0x8] sm:$0x7f]
        %v474 = vmul.f32 %v472, 0.5
        %v475 = vmul.f32 %v473, 0.5
        %v476 = vmul.f32 %v472, 0.70710677
        %v477 = vmul.f32 %v473, 0.70710677
        %v478 = verf.f32.pop %v476
        %v479 = verf.f32.pop %v477
        %v480 = vadd.f32 %v478, 1.0
        %v481 = vadd.f32 %v479, 1.0
        %v482 = vmul.f32 %v474, %v480
        %v483 = vmul.f32 %v475, %v481
        %v484 = vsub.f32 %v482, %v470
        %v485 = vsub.f32 %v483, %v471
        %486 = vst.msk [vmem:[%s383] sm:$0xff] %vm388, %v484
        %vm487 = vcmask 129024
        %488 = vst.msk [vmem:[%s383 + $0x8] sm:$0x7f] %vm487, %v485
        %v489 = vld [vmem:[#allocation2] sm:$0xff]
        %v490 = vld [vmem:[#allocation2 + $0x8] sm:$0x7f]
        %v491 = vld [vmem:[#allocation2 + $0x1] sm:$0xff]
        %v492 = vld [vmem:[#allocation2 + $0x9] sm:$0x7f]
        %s493 = sld [smem:[#allocation3 + $0x80]]
        %v494 = vstv %s493
        %v495 = vmul.f32 %v494, %v489
        %v496 = vmul.f32 %v494, %v490
        %s497 = sld [smem:[#allocation5 + $0x80]]
        %v498 = vstv %s497
        %v499 = vmul.f32 %v498, %v491
        %v500 = vmul.f32 %v498, %v492
        %v501 = vadd.f32 %v495, %v499
        %v502 = vadd.f32 %v496, %v500
        %v503 = vld [vmem:[%s415] sm:$0xff]
        %v504 = vld [vmem:[%s415 + $0x8] sm:$0x7f]
        %v505 = vld [vmem:[%s415 + $0x1] sm:$0xff]
        %v506 = vld [vmem:[%s415 + $0x9] sm:$0x7f]
        %s507 = sld [smem:[#allocation3 + $0x81]]
        %v508 = vstv %s507
        %v509 = vmul.f32 %v508, %v503
        %v510 = vmul.f32 %v508, %v504
        %s511 = sld [smem:[#allocation5 + $0x81]]
        %v512 = vstv %s511
        %v513 = vmul.f32 %v512, %v505
        %v514 = vmul.f32 %v512, %v506
        %v515 = vadd.f32 %v509, %v513
        %v516 = vadd.f32 %v510, %v514
        %v517 = vadd.f32 %v501, %v515
        %v518 = vadd.f32 %v502, %v516
        %v519 = vld [vmem:[%s432] sm:$0xff]
        %v520 = vld [vmem:[%s432 + $0x8] sm:$0x7f]
        %v521 = vld [vmem:[%s432 + $0x1] sm:$0xff]
        %v522 = vld [vmem:[%s432 + $0x9] sm:$0x7f]
        %s523 = sld [smem:[#allocation3 + $0x82]]
        %v524 = vstv %s523
        %v525 = vmul.f32 %v524, %v519
        %v526 = vmul.f32 %v524, %v520
        %s527 = sld [smem:[#allocation5 + $0x82]]
        %v528 = vstv %s527
        %v529 = vmul.f32 %v528, %v521
        %v530 = vmul.f32 %v528, %v522
        %v531 = vadd.f32 %v525, %v529
        %v532 = vadd.f32 %v526, %v530
        %v533 = vadd.f32 %v517, %v531
        %v534 = vadd.f32 %v518, %v532
        %v535 = vld [vmem:[%s449] sm:$0xff]
        %v536 = vld [vmem:[%s449 + $0x8] sm:$0x7f]
        %v537 = vld [vmem:[%s449 + $0x1] sm:$0xff]
        %v538 = vld [vmem:[%s449 + $0x9] sm:$0x7f]
        %s539 = sld [smem:[#allocation3 + $0x83]]
        %v540 = vstv %s539
        %v541 = vmul.f32 %v540, %v535
        %v542 = vmul.f32 %v540, %v536
        %s543 = sld [smem:[#allocation5 + $0x83]]
        %v544 = vstv %s543
        %v545 = vmul.f32 %v544, %v537
        %v546 = vmul.f32 %v544, %v538
        %v547 = vadd.f32 %v541, %v545
        %v548 = vadd.f32 %v542, %v546
        %v549 = vadd.f32 %v533, %v547
        %v550 = vadd.f32 %v534, %v548
        %s551 = sld [smem:[#allocation7 + $0x1]]
        %v552 = vstv %s551
        %v553 = vadd.f32 %v549, %v552
        %v554 = vadd.f32 %v550, %v552
        %v555 = vmax.f32 %v553, 0.0
        %v556 = vmax.f32 %v554, 0.0
        %s557 = scalar_lea.vmem %s375, 16
        %v558 = vld [vmem:[%s557] sm:$0xff]
        %v559 = vld [vmem:[%s557 + $0x8] sm:$0x7f]
        %v560 = vmul.f32 %v558, 0.5
        %v561 = vmul.f32 %v559, 0.5
        %v562 = vmul.f32 %v558, 0.70710677
        %v563 = vmul.f32 %v559, 0.70710677
        %v564 = verf.f32.pop %v562
        %v565 = verf.f32.pop %v563
        %v566 = vadd.f32 %v564, 1.0
        %v567 = vadd.f32 %v565, 1.0
        %v568 = vmul.f32 %v560, %v566
        %v569 = vmul.f32 %v561, %v567
        %v570 = vsub.f32 %v568, %v555
        %v571 = vsub.f32 %v569, %v556
        %s572 = scalar_lea.vmem %s383, 16
        %573 = vst.msk [vmem:[%s572] sm:$0xff] %vm388, %v570
        %574 = vst.msk [vmem:[%s572 + $0x8] sm:$0x7f] %vm487, %v571
        %v575 = vld [vmem:[#allocation2] sm:$0xff]
        %v576 = vld [vmem:[#allocation2 + $0x8] sm:$0x7f]
        %v577 = vld [vmem:[#allocation2 + $0x1] sm:$0xff]
        %v578 = vld [vmem:[#allocation2 + $0x9] sm:$0x7f]
        %s579 = sld [smem:[#allocation3 + $0x100]]
        %v580 = vstv %s579
        %v581 = vmul.f32 %v580, %v575
        %v582 = vmul.f32 %v580, %v576
        %s583 = sld [smem:[#allocation5 + $0x100]]
        %v584 = vstv %s583
        %v585 = vmul.f32 %v584, %v577
        %v586 = vmul.f32 %v584, %v578
        %v587 = vadd.f32 %v581, %v585
        %v588 = vadd.f32 %v582, %v586
        %v589 = vld [vmem:[%s415] sm:$0xff]
        %v590 = vld [vmem:[%s415 + $0x8] sm:$0x7f]
        %v591 = vld [vmem:[%s415 + $0x1] sm:$0xff]
        %v592 = vld [vmem:[%s415 + $0x9] sm:$0x7f]
        %s593 = sld [smem:[#allocation3 + $0x101]]
        %v594 = vstv %s593
        %v595 = vmul.f32 %v594, %v589
        %v596 = vmul.f32 %v594, %v590
        %s597 = sld [smem:[#allocation5 + $0x101]]
        %v598 = vstv %s597
        %v599 = vmul.f32 %v598, %v591
        %v600 = vmul.f32 %v598, %v592
        %v601 = vadd.f32 %v595, %v599
        %v602 = vadd.f32 %v596, %v600
        %v603 = vadd.f32 %v587, %v601
        %v604 = vadd.f32 %v588, %v602
        %v605 = vld [vmem:[%s432] sm:$0xff]
        %v606 = vld [vmem:[%s432 + $0x8] sm:$0x7f]
        %v607 = vld [vmem:[%s432 + $0x1] sm:$0xff]
        %v608 = vld [vmem:[%s432 + $0x9] sm:$0x7f]
        %s609 = sld [smem:[#allocation3 + $0x102]]
        %v610 = vstv %s609
        %v611 = vmul.f32 %v610, %v605
        %v612 = vmul.f32 %v610, %v606
        %s613 = sld [smem:[#allocation5 + $0x102]]
        %v614 = vstv %s613
        %v615 = vmul.f32 %v614, %v607
        %v616 = vmul.f32 %v614, %v608
        %v617 = vadd.f32 %v611, %v615
        %v618 = vadd.f32 %v612, %v616
        %v619 = vadd.f32 %v603, %v617
        %v620 = vadd.f32 %v604, %v618
        %v621 = vld [vmem:[%s449] sm:$0xff]
        %v622 = vld [vmem:[%s449 + $0x8] sm:$0x7f]
        %v623 = vld [vmem:[%s449 + $0x1] sm:$0xff]
        %v624 = vld [vmem:[%s449 + $0x9] sm:$0x7f]
        %s625 = sld [smem:[#allocation3 + $0x103]]
        %v626 = vstv %s625
        %v627 = vmul.f32 %v626, %v621
        %v628 = vmul.f32 %v626, %v622
        %s629 = sld [smem:[#allocation5 + $0x103]]
        %v630 = vstv %s629
        %v631 = vmul.f32 %v630, %v623
        %v632 = vmul.f32 %v630, %v624
        %v633 = vadd.f32 %v627, %v631
        %v634 = vadd.f32 %v628, %v632
        %v635 = vadd.f32 %v619, %v633
        %v636 = vadd.f32 %v620, %v634
        %s637 = sld [smem:[#allocation7 + $0x2]]
        %v638 = vstv %s637
        %v639 = vadd.f32 %v635, %v638
        %v640 = vadd.f32 %v636, %v638
        %v641 = vmax.f32 %v639, 0.0
        %v642 = vmax.f32 %v640, 0.0
        %s643 = scalar_lea.vmem %s375, 32
        %v644 = vld [vmem:[%s643] sm:$0xff]
        %v645 = vld [vmem:[%s643 + $0x8] sm:$0x7f]
        %v646 = vmul.f32 %v644, 0.5
        %v647 = vmul.f32 %v645, 0.5
        %v648 = vmul.f32 %v644, 0.70710677
        %v649 = vmul.f32 %v645, 0.70710677
        %v650 = verf.f32.pop %v648
        %v651 = verf.f32.pop %v649
        %v652 = vadd.f32 %v650, 1.0
        %v653 = vadd.f32 %v651, 1.0
        %v654 = vmul.f32 %v646, %v652
        %v655 = vmul.f32 %v647, %v653
        %v656 = vsub.f32 %v654, %v641
        %v657 = vsub.f32 %v655, %v642
        %s658 = scalar_lea.vmem %s383, 32
        %659 = vst.msk [vmem:[%s658] sm:$0xff] %vm388, %v656
        %660 = vst.msk [vmem:[%s658 + $0x8] sm:$0x7f] %vm487, %v657
        %v661 = vld [vmem:[#allocation2] sm:$0xff]
        %v662 = vld [vmem:[#allocation2 + $0x8] sm:$0x7f]
        %v663 = vld [vmem:[#allocation2 + $0x1] sm:$0xff]
        %v664 = vld [vmem:[#allocation2 + $0x9] sm:$0x7f]
        %s665 = sld [smem:[#allocation3 + $0x180]]
        %v666 = vstv %s665
        %v667 = vmul.f32 %v666, %v661
        %v668 = vmul.f32 %v666, %v662
        %s669 = sld [smem:[#allocation5 + $0x180]]
        %v670 = vstv %s669
        %v671 = vmul.f32 %v670, %v663
        %v672 = vmul.f32 %v670, %v664
        %v673 = vadd.f32 %v667, %v671
        %v674 = vadd.f32 %v668, %v672
        %v675 = vld [vmem:[%s415] sm:$0xff]
        %v676 = vld [vmem:[%s415 + $0x8] sm:$0x7f]
        %v677 = vld [vmem:[%s415 + $0x1] sm:$0xff]
        %v678 = vld [vmem:[%s415 + $0x9] sm:$0x7f]
        %s679 = sld [smem:[#allocation3 + $0x181]]
        %v680 = vstv %s679
        %v681 = vmul.f32 %v680, %v675
        %v682 = vmul.f32 %v680, %v676
        %s683 = sld [smem:[#allocation5 + $0x181]]
        %v684 = vstv %s683
        %v685 = vmul.f32 %v684, %v677
        %v686 = vmul.f32 %v684, %v678
        %v687 = vadd.f32 %v681, %v685
        %v688 = vadd.f32 %v682, %v686
        %v689 = vadd.f32 %v673, %v687
        %v690 = vadd.f32 %v674, %v688
        %v691 = vld [vmem:[%s432] sm:$0xff]
        %v692 = vld [vmem:[%s432 + $0x8] sm:$0x7f]
        %v693 = vld [vmem:[%s432 + $0x1] sm:$0xff]
        %v694 = vld [vmem:[%s432 + $0x9] sm:$0x7f]
        %s695 = sld [smem:[#allocation3 + $0x182]]
        %v696 = vstv %s695
        %v697 = vmul.f32 %v696, %v691
        %v698 = vmul.f32 %v696, %v692
        %s699 = sld [smem:[#allocation5 + $0x182]]
        %v700 = vstv %s699
        %v701 = vmul.f32 %v700, %v693
        %v702 = vmul.f32 %v700, %v694
        %v703 = vadd.f32 %v697, %v701
        %v704 = vadd.f32 %v698, %v702
        %v705 = vadd.f32 %v689, %v703
        %v706 = vadd.f32 %v690, %v704
        %v707 = vld [vmem:[%s449] sm:$0xff]
        %v708 = vld [vmem:[%s449 + $0x8] sm:$0x7f]
        %v709 = vld [vmem:[%s449 + $0x1] sm:$0xff]
        %v710 = vld [vmem:[%s449 + $0x9] sm:$0x7f]
        %s711 = sld [smem:[#allocation3 + $0x183]]
        %v712 = vstv %s711
        %v713 = vmul.f32 %v712, %v707
        %v714 = vmul.f32 %v712, %v708
        %s715 = sld [smem:[#allocation5 + $0x183]]
        %v716 = vstv %s715
        %v717 = vmul.f32 %v716, %v709
        %v718 = vmul.f32 %v716, %v710
        %v719 = vadd.f32 %v713, %v717
        %v720 = vadd.f32 %v714, %v718
        %v721 = vadd.f32 %v705, %v719
        %v722 = vadd.f32 %v706, %v720
        %s723 = sld [smem:[#allocation7 + $0x3]]
        %v724 = vstv %s723
        %v725 = vadd.f32 %v721, %v724
        %v726 = vadd.f32 %v722, %v724
        %v727 = vmax.f32 %v725, 0.0
        %v728 = vmax.f32 %v726, 0.0
        %s729 = scalar_lea.vmem %s375, 48
        %v730 = vld [vmem:[%s729] sm:$0xff]
        %v731 = vld [vmem:[%s729 + $0x8] sm:$0x7f]
        %v732 = vmul.f32 %v730, 0.5
        %v733 = vmul.f32 %v731, 0.5
        %v734 = vmul.f32 %v730, 0.70710677
        %v735 = vmul.f32 %v731, 0.70710677
        %v736 = verf.f32.pop %v734
        %v737 = verf.f32.pop %v735
        %v738 = vadd.f32 %v736, 1.0
        %v739 = vadd.f32 %v737, 1.0
        %v740 = vmul.f32 %v732, %v738
        %v741 = vmul.f32 %v733, %v739
        %v742 = vsub.f32 %v740, %v727
        %v743 = vsub.f32 %v741, %v728
        %s744 = scalar_lea.vmem %s383, 48
        %745 = vst.msk [vmem:[%s744] sm:$0xff] %vm388, %v742
        %746 = vst.msk [vmem:[%s744 + $0x8] sm:$0x7f] %vm487, %v743
        %p747 = scmp.lt.s32.totalorder %s23, 1
        %s748 = scalar_select %p747, %s23, 1
        %p749 = scmp.lt.s32.totalorder %s24, 0
        %s750 = scalar_select %p749, %s24, 0
        %s751 = smul.addr %s748, 8
        %s752 = sadd.s32 %s750, %s751
        %s753 = smul.addr %s752, 8
        %s754 = scalar_lea.vmem %s6, %s753
        // Predicated region
        $region57: #{tpu_custom_call.1} parent=43 // pred_check
          %p755 = pneg %p198
        $region58: #{tpu_custom_call.1} parent=43 // pred_check_branch
          %757 = sbr.rel (%p755) target = $region60
        $region59: #{tpu_custom_call.1} parent=43 // pred_region
          _
        $region60: #{tpu_custom_call.1} parent=43 // pred_fallthru
          _
      $region44: #{tpu_custom_call.1} parent=5 // pred_fallthru
        _
      %p758 = scmp.le.s32.totalorder 2, %s14
      // Predicated region
      $region61: #{tpu_custom_call.1} parent=5 // pred_check
        %p759 = pneg %p758
      $region62: #{tpu_custom_call.1} parent=5 // pred_check_branch
        %761 = sbr.rel (%p759) target = $region64
      $region63: #{tpu_custom_call.1} parent=5 // pred_region
        %s762 = ssub.s32 %s14, 2
        // Predicated region
        $region65: #{tpu_custom_call.1} parent=63 // pred_check
          %p763 = pneg %p204
        $region66: #{tpu_custom_call.1} parent=63 // pred_check_branch
          %765 = sbr.rel (%p763) target = $region68
        $region67: #{tpu_custom_call.1} parent=63 // pred_region
          %p766 = scmp.lt.s32.totalorder %s25, 1
          %s767 = scalar_select %p766, %s25, 1
          %p768 = scmp.lt.s32.totalorder %s26, 0
          %s769 = scalar_select %p768, %s26, 0
          %s770 = smul.addr %s767, 8
          %s771 = sadd.s32 %s769, %s770
          %s772 = smul.addr %s771, 8
          %s773 = scalar_lea.vmem %s6, %s772
        $region68: #{tpu_custom_call.1} parent=63 // pred_fallthru
          _
      $region64: #{tpu_custom_call.1} parent=5 // pred_fallthru
        _
    $region6: #{tpu_custom_call.1} parent=1 // loop_footer
      %s18 = sadd.s32 1, %s14
    $region7: #{tpu_custom_call.1} parent=1 // loop_footer_branch
      %13 = sbr.rel target = $region3
    $region8: #{tpu_custom_call.1} parent=1 // loop_exit
      _
    %774 = vsyncpa [#allocation4], 1
    %s775 = scalar_lea.sflag [#allocation4], 1
    %776 = vsyncpa %s775, 1
    %777 = vsyncpa [#allocation6], 1

</llo_original>
